<compile_context>
chip_gen: v7x
topology: tpu7x:2x2x1
jax: 0.10.0
libtpu: 0.0.40
codegen_flags: <defaults>
</compile_context>

<pallas_src>
import jax
import jax.numpy as jnp
from jax.experimental import pallas as pl
from jax.experimental.pallas import tpu as pltpu

GRAM_N = 3
DIM = 1  # n-gram axis (sequence axis) — fixed to 1 for this kernel.


def ngram_kernel(x_ref, o_ref):
    """One (batch-tile, gram-offset) pair per grid step.

    x_ref: (bB, S, D)      VMEM  (block index constant across the gram axis)
    o_ref: (bB, out_n, D)  VMEM  (gram dim squeezed out by the BlockSpec)
    """
    bB, S, D = x_ref.shape
    out_n = o_ref.shape[1]
    gram_n = out_n - S + 1

    g = pl.program_id(1)

    # One statically-sliced branch per gram offset (gram_n is small). Writes
    # exactly: `shift` leading zero rows, x, `g` trailing zero rows — fully
    # covering the output block with no scratch and no overlapping stores.
    for g_static in range(gram_n):

        @pl.when(g == g_static)
        def _(g_static=g_static):
            shift = (gram_n - 1) - g_static
            if shift > 0:
                o_ref[:, 0:shift, :] = jnp.zeros((bB, shift, D), o_ref.dtype)
            o_ref[:, shift:shift + S, :] = x_ref[...]
            if g_static > 0:
                o_ref[:, shift + S:out_n, :] = jnp.zeros(
                    (bB, g_static, D), o_ref.dtype)


def _batch_block(B, S, D, out_n, itemsize, budget_bytes=2 << 20):
    """Largest divisor of B whose (input + one output slab) tile fits budget."""
    per_batch = (S * D + out_n * D) * itemsize
    bB = max(1, min(B, budget_bytes // max(per_batch, 1)))
    while B % bB:
        bB -= 1
    return bB


def ngram(x, gram_n=GRAM_N):
    B, S, D = x.shape
    out_n = S + gram_n - 1
    itemsize = jnp.dtype(x.dtype).itemsize
    bB = _batch_block(B, S, D, out_n, itemsize)

    bytes_accessed = (B * S * D + B * gram_n * out_n * D) * itemsize

    return pl.pallas_call(
        ngram_kernel,
        out_shape=jax.ShapeDtypeStruct((B, gram_n, out_n, D), x.dtype),
        grid_spec=pltpu.PrefetchScalarGridSpec(
            num_scalar_prefetch=0,
            # gram axis innermost: x's block index is constant across it, so
            # the input tile is DMA'd once per batch tile.
            grid=(B // bB, gram_n),
            in_specs=[pl.BlockSpec((bB, S, D), lambda b, g: (b, 0, 0))],
            # gram dim squeezed (None) -> kernel sees (bB, out_n, D).
            out_specs=pl.BlockSpec((bB, None, out_n, D),
                                   lambda b, g: (b, g, 0, 0)),
        ),
        compiler_params=pltpu.CompilerParams(
            dimension_semantics=("parallel", "parallel"),
            vmem_limit_bytes=32 << 20,
        ),
        cost_estimate=pl.CostEstimate(
            flops=0, transcendentals=0, bytes_accessed=bytes_accessed),
    )(x)


def ngram_ref(x, gram_n=GRAM_N):
    """Plain-JAX reference of the torch forward (for verification)."""
    B, S, D = x.shape
    out_n = S + gram_n - 1
    zeros = jnp.zeros((B, gram_n - 1, D), x.dtype)
    padded = jnp.concatenate([zeros, x, zeros], axis=1)
    return jnp.stack([padded[:, g:g + out_n, :] for g in range(gram_n)],
                     axis=1)


if __name__ == "__main__":
    # NGram has no learnable parameters — nothing to initialize.
    key = jax.random.PRNGKey(0)
    B, S, D = 2, 8, 32
    x = jax.random.normal(key, (B, S, D), dtype=jnp.float32)

    out = jax.jit(ngram)(x)
    out = jax.block_until_ready(out)

    ref = ngram_ref(x)
    assert out.shape == (B, GRAM_N, S + GRAM_N - 1, D), out.shape
    assert jnp.allclose(out, ref), "mismatch vs. reference"

    print("KERNEL_OK")
</pallas_src>

<mosaic_0001>
module attributes {stable_mosaic.version = 11 : i64} {
  func.func @ngram_kernel(%arg0: i32, %arg1: i32, %arg2: memref<2x8x32xf32, #tpu.memory_space<vmem>>, %arg3: memref<2x1x10x32xf32, #tpu.memory_space<vmem>>) attributes {dimension_semantics = [#tpu.dimension_semantics<parallel>, #tpu.dimension_semantics<parallel>], iteration_bounds = array<i64: 1, 3>, scalar_prefetch = 0 : i64, scratch_operands = 0 : i64, tpu.core_type = #tpu.core_type<tc>, window_params = [{transform_indices = @transform_0, window_bounds = array<i64: 2, 8, 32>}, {transform_indices = @transform_1, window_bounds = array<i64: 2, 1, 10, 32>}]} {
    %c0_i32 = arith.constant 0 : i32
    %0 = arith.cmpi eq, %arg1, %c0_i32 : i32
    %1 = arith.extui %0 : i1 to i32
    %c0_i32_0 = arith.constant 0 : i32
    %2 = arith.cmpi ne, %1, %c0_i32_0 : i32
    scf.if %2 {
      %cst = arith.constant 0.000000e+00 : f32
      %9 = vector.broadcast %cst : f32 to vector<2x2x32xf32>
      %c0 = arith.constant 0 : index
      %c0_3 = arith.constant 0 : index
      %c0_4 = arith.constant 0 : index
      %c0_5 = arith.constant 0 : index
      %10 = vector.load %arg3[%c0, %c0_3, %c0_4, %c0_5] : memref<2x1x10x32xf32, #tpu.memory_space<vmem>>, vector<2x1x2x32xf32>
      %11 = vector.shape_cast %10 : vector<2x1x2x32xf32> to vector<2x2x32xf32>
      %12 = vector.shape_cast %9 : vector<2x2x32xf32> to vector<2x1x2x32xf32>
      tpu.vector_store %arg3[%c0, %c0_3, %c0_4, %c0_5], %12 {strides = array<i32>} : memref<2x1x10x32xf32, #tpu.memory_space<vmem>>, vector<2x1x2x32xf32>,
      %c0_6 = arith.constant 0 : index
      %c0_7 = arith.constant 0 : index
      %c0_8 = arith.constant 0 : index
      %13 = vector.load %arg2[%c0_6, %c0_7, %c0_8] : memref<2x8x32xf32, #tpu.memory_space<vmem>>, vector<2x8x32xf32>
      %c0_9 = arith.constant 0 : index
      %c0_10 = arith.constant 0 : index
      %c2 = arith.constant 2 : index
      %c0_11 = arith.constant 0 : index
      %14 = vector.load %arg3[%c0_9, %c0_10, %c2, %c0_11] : memref<2x1x10x32xf32, #tpu.memory_space<vmem>>, vector<2x1x8x32xf32>
      %15 = vector.shape_cast %14 : vector<2x1x8x32xf32> to vector<2x8x32xf32>
      %16 = vector.shape_cast %13 : vector<2x8x32xf32> to vector<2x1x8x32xf32>
      tpu.vector_store %arg3[%c0_9, %c0_10, %c2, %c0_11], %16 {strides = array<i32>} : memref<2x1x10x32xf32, #tpu.memory_space<vmem>>, vector<2x1x8x32xf32>,
    } else {
    }
    %c1_i32 = arith.constant 1 : i32
    %3 = arith.cmpi eq, %arg1, %c1_i32 : i32
    %4 = arith.extui %3 : i1 to i32
    %c0_i32_1 = arith.constant 0 : i32
    %5 = arith.cmpi ne, %4, %c0_i32_1 : i32
    scf.if %5 {
      %cst = arith.constant 0.000000e+00 : f32
      %9 = vector.broadcast %cst : f32 to vector<2x1x32xf32>
      %c0 = arith.constant 0 : index
      %c0_3 = arith.constant 0 : index
      %c0_4 = arith.constant 0 : index
      %c0_5 = arith.constant 0 : index
      %10 = vector.load %arg3[%c0, %c0_3, %c0_4, %c0_5] : memref<2x1x10x32xf32, #tpu.memory_space<vmem>>, vector<2x1x1x32xf32>
      %11 = vector.shape_cast %10 : vector<2x1x1x32xf32> to vector<2x1x32xf32>
      %12 = vector.shape_cast %9 : vector<2x1x32xf32> to vector<2x1x1x32xf32>
      tpu.vector_store %arg3[%c0, %c0_3, %c0_4, %c0_5], %12 {strides = array<i32>} : memref<2x1x10x32xf32, #tpu.memory_space<vmem>>, vector<2x1x1x32xf32>,
      %c0_6 = arith.constant 0 : index
      %c0_7 = arith.constant 0 : index
      %c0_8 = arith.constant 0 : index
      %13 = vector.load %arg2[%c0_6, %c0_7, %c0_8] : memref<2x8x32xf32, #tpu.memory_space<vmem>>, vector<2x8x32xf32>
      %c0_9 = arith.constant 0 : index
      %c0_10 = arith.constant 0 : index
      %c1 = arith.constant 1 : index
      %c0_11 = arith.constant 0 : index
      %14 = vector.load %arg3[%c0_9, %c0_10, %c1, %c0_11] : memref<2x1x10x32xf32, #tpu.memory_space<vmem>>, vector<2x1x8x32xf32>
      %15 = vector.shape_cast %14 : vector<2x1x8x32xf32> to vector<2x8x32xf32>
      %16 = vector.shape_cast %13 : vector<2x8x32xf32> to vector<2x1x8x32xf32>
      tpu.vector_store %arg3[%c0_9, %c0_10, %c1, %c0_11], %16 {strides = array<i32>} : memref<2x1x10x32xf32, #tpu.memory_space<vmem>>, vector<2x1x8x32xf32>,
      %cst_12 = arith.constant 0.000000e+00 : f32
      %17 = vector.broadcast %cst_12 : f32 to vector<2x1x32xf32>
      %c0_13 = arith.constant 0 : index
      %c0_14 = arith.constant 0 : index
      %c9 = arith.constant 9 : index
      %c0_15 = arith.constant 0 : index
      %18 = vector.load %arg3[%c0_13, %c0_14, %c9, %c0_15] : memref<2x1x10x32xf32, #tpu.memory_space<vmem>>, vector<2x1x1x32xf32>
      %19 = vector.shape_cast %18 : vector<2x1x1x32xf32> to vector<2x1x32xf32>
      %20 = vector.shape_cast %17 : vector<2x1x32xf32> to vector<2x1x1x32xf32>
      tpu.vector_store %arg3[%c0_13, %c0_14, %c9, %c0_15], %20 {strides = array<i32>} : memref<2x1x10x32xf32, #tpu.memory_space<vmem>>, vector<2x1x1x32xf32>,
    } else {
    }
    %c2_i32 = arith.constant 2 : i32
    %6 = arith.cmpi eq, %arg1, %c2_i32 : i32
    %7 = arith.extui %6 : i1 to i32
    %c0_i32_2 = arith.constant 0 : i32
    %8 = arith.cmpi ne, %7, %c0_i32_2 : i32
    scf.if %8 {
      %c0 = arith.constant 0 : index
      %c0_3 = arith.constant 0 : index
      %c0_4 = arith.constant 0 : index
      %9 = vector.load %arg2[%c0, %c0_3, %c0_4] : memref<2x8x32xf32, #tpu.memory_space<vmem>>, vector<2x8x32xf32>
      %c0_5 = arith.constant 0 : index
      %c0_6 = arith.constant 0 : index
      %c0_7 = arith.constant 0 : index
      %c0_8 = arith.constant 0 : index
      %10 = vector.load %arg3[%c0_5, %c0_6, %c0_7, %c0_8] : memref<2x1x10x32xf32, #tpu.memory_space<vmem>>, vector<2x1x8x32xf32>
      %11 = vector.shape_cast %10 : vector<2x1x8x32xf32> to vector<2x8x32xf32>
      %12 = vector.shape_cast %9 : vector<2x8x32xf32> to vector<2x1x8x32xf32>
      tpu.vector_store %arg3[%c0_5, %c0_6, %c0_7, %c0_8], %12 {strides = array<i32>} : memref<2x1x10x32xf32, #tpu.memory_space<vmem>>, vector<2x1x8x32xf32>,
      %cst = arith.constant 0.000000e+00 : f32
      %13 = vector.broadcast %cst : f32 to vector<2x2x32xf32>
      %c0_9 = arith.constant 0 : index
      %c0_10 = arith.constant 0 : index
      %c8 = arith.constant 8 : index
      %c0_11 = arith.constant 0 : index
      %14 = vector.load %arg3[%c0_9, %c0_10, %c8, %c0_11] : memref<2x1x10x32xf32, #tpu.memory_space<vmem>>, vector<2x1x2x32xf32>
      %15 = vector.shape_cast %14 : vector<2x1x2x32xf32> to vector<2x2x32xf32>
      %16 = vector.shape_cast %13 : vector<2x2x32xf32> to vector<2x1x2x32xf32>
      tpu.vector_store %arg3[%c0_9, %c0_10, %c8, %c0_11], %16 {strides = array<i32>} : memref<2x1x10x32xf32, #tpu.memory_space<vmem>>, vector<2x1x2x32xf32>,
    } else {
    }
    return
  }
  func.func @transform_0(%arg0: i32, %arg1: i32) -> (i32, i32, i32) {
    %c0_i32 = arith.constant 0 : i32
    %c0_i32_0 = arith.constant 0 : i32
    %c0_i32_1 = arith.constant 0 : i32
    return %arg0, %c0_i32, %c0_i32_0 : i32, i32, i32
  }
  func.func @transform_1(%arg0: i32, %arg1: i32) -> (i32, i32, i32, i32) {
    %c0_i32 = arith.constant 0 : i32
    %c0_i32_0 = arith.constant 0 : i32
    %c0_i32_1 = arith.constant 0 : i32
    return %arg0, %arg1, %c0_i32, %c0_i32_0 : i32, i32, i32, i32
  }
}

</mosaic_0001>

<llo_original>
// kernel: ngram.1
$region0: #{ngram.1}
  #allocation0 [shape = 'u32[]', space=smem, size = 0x4, offset = 0x4, fixed_abs, tag = 'smem constant byte address 0x4 - core index']
  #allocation1 [shape = 'u32[144,128]{1,0:T(1,128)}', space=vmem, size = 0x12000, scoped, tag = 'internal scratch']
  %s0 = inlined_call_operand.hbm [shape: f32[2,8,32], index: 0, kind: input, shape index: {}]
  %s1 = inlined_call_operand.vmem [shape: f32[2,3,10,32], index: 1, kind: output, shape index: {}]
  %s2 = sld [smem:[#allocation0]]
  $region87: #{ngram.1} parent=0
    _
  %s4 = ssub.s32 1, %s2
  %s5 = scalar_select 0, %s4, %s2
  $region1: #{ngram.1} parent=0
    #allocation2 [shape = 'u8[8192]{0}', space=vmem, size = 0x2000, scoped, tag = 'input window, operand 0, single buffered']
    #allocation3 [shape = 's32[2]{0}', space=sflag, size = 0x8, scoped, tag = 'scoped memory for ngram.1']
    #allocation4 [shape = 'u8[32768]{0}', space=vmem, size = 0x8000, scoped, tag = 'output window, operand 0']
    %6 = vsyncpa [#allocation3], 0
    loop: start=0, step=1, limit=5
    $region2: #{ngram.1} parent=1 // loop_pre_header
      _
    $region3: #{ngram.1} parent=1 // loop_header
      %s8 = sphi 0, %s12
      %p9 = scmp.ge.s32.totalorder %s8, 5
      %s15 = sphi 0, %s27
      %s16 = sphi 0, %s23
      %s17 = sphi 0, %s15
      %s18 = sphi 0, %s16
      %s19 = sphi 0, %s17
      %s20 = sphi 0, %s18
      %s30 = sphi 0, %s32
      %s33 = sphi 0, %s30
      %s34 = sphi 0, %s33
      %s50 = sphi 0, %s34
      %s58 = sphi 0, %s60
      %s61 = sphi 0, %s58
      %s62 = sphi 0, %s61
      %s78 = sphi 0, %s62
    $region4: #{ngram.1} parent=1 // loop_header_branch
      %11 = sbr.rel (%p9) target = $region8
    $region5: #{ngram.1} parent=1 // loop_body
      %s13 = ssub.s32 %s8, 1
      %s14 = ssub.s32 %s8, 2
      %s21 = sadd.s32 1, %s16
      %p22 = scmp.ge.s32.totalorder %s21, 3
      %s23 = scalar_select %p22, 0, %s21
      %s24 = sadd.s32 1, %s15
      %s25 = scalar_select %p22, %s24, %s15
      %p26 = scmp.ge.s32.totalorder %s25, 1
      %s27 = scalar_select %p26, 0, %s25
      %s28 = ssub.s32 %s15, %s27
      %p29 = scmp.eq.s32.totalorder %s28, 0
      %s31 = sadd.s32 %s30, 1
      %s32 = scalar_select %p29, %s30, %s31
      %p35 = pneg %p29
      %p36 = scmp.eq.s32.totalorder %s8, 2
      %p37 = por %p35, %p36
      %p38 = scmp.ne.s32.totalorder %s30, %s33
      %p39 = scmp.eq.s32.totalorder %s8, 0
      %p40 = por %p38, %p39
      %p41 = scmp.ne.s32.totalorder %s30, %s33
      %p42 = scmp.eq.s32.totalorder %s13, 2
      %p43 = por %p41, %p42
      %p44 = scmp.ne.s32.totalorder %s33, %s34
      %p45 = scmp.eq.s32.totalorder %s13, 0
      %p46 = por %p44, %p45
      %p47 = scmp.ne.s32.totalorder %s33, %s34
      %p48 = scmp.eq.s32.totalorder %s14, 2
      %p49 = por %p47, %p48
      %p51 = scmp.ne.s32.totalorder %s34, %s50
      %p52 = scmp.eq.s32.totalorder %s14, 0
      %p53 = por %p51, %p52
      %s54 = ssub.s32 %s15, %s27
      %s55 = ssub.s32 %s16, %s23
      %s56 = sor.u32 %s54, %s55
      %p57 = scmp.eq.s32.totalorder %s56, 0
      %s59 = sadd.s32 %s58, 1
      %s60 = scalar_select %p57, %s58, %s59
      %p63 = pneg %p57
      %p64 = scmp.eq.s32.totalorder %s8, 2
      %p65 = por %p63, %p64
      %p66 = scmp.ne.s32.totalorder %s58, %s61
      %p67 = scmp.eq.s32.totalorder %s8, 0
      %p68 = por %p66, %p67
      %p69 = scmp.ne.s32.totalorder %s58, %s61
      %p70 = scmp.eq.s32.totalorder %s13, 2
      %p71 = por %p69, %p70
      %p72 = scmp.ne.s32.totalorder %s61, %s62
      %p73 = scmp.eq.s32.totalorder %s13, 0
      %p74 = por %p72, %p73
      %p75 = scmp.ne.s32.totalorder %s61, %s62
      %p76 = scmp.eq.s32.totalorder %s14, 2
      %p77 = por %p75, %p76
      %p79 = scmp.ne.s32.totalorder %s62, %s78
      %p80 = scmp.eq.s32.totalorder %s14, 0
      %p81 = por %p79, %p80
      %p82 = scmp.le.s32.totalorder 1, %s8
      %p83 = scmp.lt.s32.totalorder %s8, 4
      %p84 = pnand %p82, %p83
      %p85 = pneg %p84
      // Predicated region
      $region9: #{ngram.1} parent=5 // pred_check
        _
      $region10: #{ngram.1} parent=5 // pred_check_branch
        %87 = sbr.rel (%p84) target = $region12
      $region11: #{ngram.1} parent=5 // pred_region
        %s88 = ssub.s32 %s8, 1
        // Predicated region
        $region13: #{ngram.1} parent=11 // pred_check
          %p89 = pneg %p46
        $region14: #{ngram.1} parent=11 // pred_check_branch
          %91 = sbr.rel (%p89) target = $region16
        $region15: #{ngram.1} parent=11 // pred_region
          %s92 = smul.u32 2, %s17
          %s94 = ssub.s32 256, 256
          %95 = vsyncadd [#allocation3], %s94
          %s96 = smul.addr %s92, 128
          %s97 = scalar_lea.hbm %s0, %s96
          %s98 = sshll.u32 [#allocation2], 4
          %s99 = int_to_ptr.vmem [resolvable:$true] %s98
          %104 = dma.hbm_to_vmem [thread:$0]  %s97, 256, %s99, [#allocation3], 128, 128, 8
        $region16: #{ngram.1} parent=11 // pred_fallthru
          _
      $region12: #{ngram.1} parent=5 // pred_fallthru
        _
      %p105 = scmp.lt.s32.totalorder %s8, 3
      // Predicated region
      $region17: #{ngram.1} parent=5 // pred_check
        %p106 = pneg %p105
      $region18: #{ngram.1} parent=5 // pred_check_branch
        %108 = sbr.rel (%p106) target = $region20
      $region19: #{ngram.1} parent=5 // pred_region
        _
      $region20: #{ngram.1} parent=5 // pred_fallthru
        _
      %p109 = scmp.le.s32.totalorder 1, %s8
      %p110 = scmp.lt.s32.totalorder %s8, 4
      %p111 = pnand %p109, %p110
      %p112 = pneg %p111
      // Predicated region
      $region21: #{ngram.1} parent=5 // pred_check
        _
      $region22: #{ngram.1} parent=5 // pred_check_branch
        %114 = sbr.rel (%p111) target = $region24
      $region23: #{ngram.1} parent=5 // pred_region
        %s115 = ssub.s32 %s8, 1
        // Predicated region
        $region25: #{ngram.1} parent=23 // pred_check
          %p116 = pneg %p46
        $region26: #{ngram.1} parent=23 // pred_check_branch
          %118 = sbr.rel (%p116) target = $region28
        $region27: #{ngram.1} parent=23 // pred_region
          %119 = dma.done [#allocation3], 256
        $region28: #{ngram.1} parent=23 // pred_fallthru
          _
        %p120 = pneg %p46
        %p121 = pneg %p43
        %p122 = pneg %p74
        %p123 = pneg %p71
        %s124 = sand.u32 %s61, 1
        %s125 = sand.u32 %s61, 1
        %s126 = smul.addr %s125, 32
        %s127 = scalar_lea.vmem [#allocation4], %s126
        %s128 = smul.u32 2, %s17
        %s129 = smul.u32 2, %s17
        %p130 = scmp.eq.s32.totalorder %s18, 0
        // Predicated region
        $region29: #{ngram.1} parent=23 // pred_check
          %p131 = pneg %p130
        $region30: #{ngram.1} parent=23 // pred_check_branch
          %133 = sbr.rel (%p131) target = $region32
        $region31: #{ngram.1} parent=23 // pred_region
          %vm134 = vcmask 254976
          %135 = vst.msk [vmem:[%s127] sm:$0x3] %vm134, 0.0
          %136 = vst.msk [vmem:[%s127 + $0x10] sm:$0x3] %vm134, 0.0
          %v137 = vld [vmem:[#allocation2] sm:$0xff]
          %v138 = vld [vmem:[#allocation2 + $0x8] sm:$0xff]
          %vm139 = vcmask 261120
          %140 = vst.msk [vmem:[%s127 + $0x2] sm:$0xff] %vm139, %v137
          %141 = vst.msk [vmem:[%s127 + $0x12] sm:$0xff] %vm139, %v138
        $region32: #{ngram.1} parent=23 // pred_fallthru
          _
        %p142 = scmp.eq.s32.totalorder %s18, 1
        // Predicated region
        $region33: #{ngram.1} parent=23 // pred_check
          %p143 = pneg %p142
        $region34: #{ngram.1} parent=23 // pred_check_branch
          %145 = sbr.rel (%p143) target = $region36
        $region35: #{ngram.1} parent=23 // pred_region
          %vm146 = vcmask 253952
          %147 = vst.msk [vmem:[%s127] sm:$0x1] %vm146, 0.0
          %148 = vst.msk [vmem:[%s127 + $0x10] sm:$0x1] %vm146, 0.0
          %v149 = vld [vmem:[#allocation2] sm:$0xff]
          %v150 = vld [vmem:[#allocation2 + $0x8] sm:$0xff]
          %vm151 = vcmask 261120
          %152 = vst.msk [vmem:[%s127 + $0x1] sm:$0xff] %vm151, %v149
          %153 = vst.msk [vmem:[%s127 + $0x11] sm:$0xff] %vm151, %v150
          %154 = vst.msk [vmem:[%s127 + $0x9] sm:$0x1] %vm146, 0.0
          %155 = vst.msk [vmem:[%s127 + $0x19] sm:$0x1] %vm146, 0.0
        $region36: #{ngram.1} parent=23 // pred_fallthru
          _
        %p156 = scmp.eq.s32.totalorder %s18, 2
        // Predicated region
        $region37: #{ngram.1} parent=23 // pred_check
          %p157 = pneg %p156
        $region38: #{ngram.1} parent=23 // pred_check_branch
          %159 = sbr.rel (%p157) target = $region40
        $region39: #{ngram.1} parent=23 // pred_region
          %v160 = vld [vmem:[#allocation2] sm:$0xff]
          %v161 = vld [vmem:[#allocation2 + $0x8] sm:$0xff]
          %vm162 = vcmask 261120
          %163 = vst.msk [vmem:[%s127] sm:$0xff] %vm162, %v160
          %164 = vst.msk [vmem:[%s127 + $0x10] sm:$0xff] %vm162, %v161
          %vm165 = vcmask 254976
          %166 = vst.msk [vmem:[%s127 + $0x8] sm:$0x3] %vm165, 0.0
          %167 = vst.msk [vmem:[%s127 + $0x18] sm:$0x3] %vm165, 0.0
        $region40: #{ngram.1} parent=23 // pred_fallthru
          _
        %s168 = sand.u32 %s61, 1
        %s169 = sand.u32 %s61, 1
        %s170 = smul.addr %s169, 32
        %s171 = scalar_lea.vmem [#allocation4], %s170
        // Predicated region
        $region41: #{ngram.1} parent=23 // pred_check
          %p172 = pneg %p71
        $region42: #{ngram.1} parent=23 // pred_check_branch
          %174 = sbr.rel (%p172) target = $region44
        $region43: #{ngram.1} parent=23 // pred_region
          %s175 = smul.u32 2, %s17
          %s176 = smul.addr %s18, 2
          %s177 = smul.addr %s175, 6
          %s178 = sadd.s32 %s176, %s177
          %s179 = smul.addr %s178, 8
          %s180 = scalar_lea.vmem %s1, %s179
          // Predicated region
          $region45: #{ngram.1} parent=43 // pred_check
            _
          $region46: #{ngram.1} parent=43 // pred_check_branch
            %182 = sbr.rel (0) target = $region48
          $region47: #{ngram.1} parent=43 // pred_region
            // Predicated region
            $region49: #{ngram.1} parent=47 // pred_check
              _
            $region50: #{ngram.1} parent=47 // pred_check_branch
              %184 = sbr.rel (0) target = $region52
            $region51: #{ngram.1} parent=47 // pred_region
              // Predicated region
              $region64: #{ngram.1} parent=51 // pred_check
                _
              $region65: #{ngram.1} parent=51 // pred_check_branch
                %205 = sbr.rel (0) target = $region67
              $region66: #{ngram.1} parent=51 // pred_region
                loop: start=0, step=1, limit=1
                $region68: #{ngram.1} parent=66 // loop_pre_header
                  _
                $region69: #{ngram.1} parent=66 // loop_header
                  %s207 = sphi 0, %s211
                  %p208 = scmp.ge.s32.totalorder %s207, 1
                  %s212 = sphi %s171, %s171
                  %s213 = sphi %s180, %s180
                $region70: #{ngram.1} parent=66 // loop_header_branch
                  %210 = sbr.rel (%p208) target = $region74
                $region71: #{ngram.1} parent=66 // loop_body
                  %v214 = vld [vmem:[%s212] sm:$0xff]
                  %215 = vst [vmem:[%s213] sm:$0xff] %v214
                  %v216 = vld [vmem:[%s212 + $0x8] sm:$0xff]
                  %217 = vst [vmem:[%s213 + $0x8] sm:$0xff] %v216
                  %v218 = vld [vmem:[%s212 + $0x10] sm:$0xff]
                  %219 = vst [vmem:[%s213 + $0x30] sm:$0xff] %v218
                  %v220 = vld [vmem:[%s212 + $0x18] sm:$0xff]
                  %221 = vst [vmem:[%s213 + $0x38] sm:$0xff] %v220
                $region72: #{ngram.1} parent=66 // loop_footer
                  %s211 = sadd.s32 1, %s207
                $region73: #{ngram.1} parent=66 // loop_footer_branch
                  %206 = sbr.rel target = $region69
                $region74: #{ngram.1} parent=66 // loop_exit
                  _
              $region67: #{ngram.1} parent=51 // pred_fallthru
                _
              // Predicated region
              $region75: #{ngram.1} parent=51 // pred_check
                _
              $region76: #{ngram.1} parent=51 // pred_check_branch
                %223 = sbr.rel target = $region78
              $region77: #{ngram.1} parent=51 // pred_region
                _
              $region78: #{ngram.1} parent=51 // pred_fallthru
                _
            $region52: #{ngram.1} parent=47 // pred_fallthru
              _
            // Predicated region
            $region53: #{ngram.1} parent=47 // pred_check
              _
            $region54: #{ngram.1} parent=47 // pred_check_branch
              %186 = sbr.rel target = $region56
            $region55: #{ngram.1} parent=47 // pred_region
              loop: start=0, step=1, limit=1
              $region57: #{ngram.1} parent=55 // loop_pre_header
                _
              $region58: #{ngram.1} parent=55 // loop_header
                %s189 = sphi 0, %s193
                %p190 = scmp.ge.s32.totalorder %s189, 1
                %s194 = sphi %s171, %s171
                %s195 = sphi %s180, %s180
              $region59: #{ngram.1} parent=55 // loop_header_branch
                %192 = sbr.rel (%p190) target = $region63
              $region60: #{ngram.1} parent=55 // loop_body
                %v196 = vld [vmem:[%s194] sm:$0xff]
                %197 = vst [vmem:[%s195] sm:$0xff] %v196
                %v198 = vld [vmem:[%s194 + $0x8] sm:$0xff]
                %199 = vst [vmem:[%s195 + $0x8] sm:$0xff] %v198
                %v200 = vld [vmem:[%s194 + $0x10] sm:$0xff]
                %201 = vst [vmem:[%s195 + $0x30] sm:$0xff] %v200
                %v202 = vld [vmem:[%s194 + $0x18] sm:$0xff]
                %203 = vst [vmem:[%s195 + $0x38] sm:$0xff] %v202
              $region61: #{ngram.1} parent=55 // loop_footer
                %s193 = sadd.s32 1, %s189
              $region62: #{ngram.1} parent=55 // loop_footer_branch
                %188 = sbr.rel target = $region58
              $region63: #{ngram.1} parent=55 // loop_exit
                _
            $region56: #{ngram.1} parent=47 // pred_fallthru
              _
          $region48: #{ngram.1} parent=43 // pred_fallthru
            _
          %224 = vnop
        $region44: #{ngram.1} parent=23 // pred_fallthru
          _
      $region24: #{ngram.1} parent=5 // pred_fallthru
        _
      %p225 = scmp.le.s32.totalorder 2, %s8
      // Predicated region
      $region79: #{ngram.1} parent=5 // pred_check
        %p226 = pneg %p225
      $region80: #{ngram.1} parent=5 // pred_check_branch
        %228 = sbr.rel (%p226) target = $region82
      $region81: #{ngram.1} parent=5 // pred_region
        %s229 = ssub.s32 %s8, 2
        // Predicated region
        $region83: #{ngram.1} parent=81 // pred_check
          %p230 = pneg %p77
        $region84: #{ngram.1} parent=81 // pred_check_branch
          %232 = sbr.rel (%p230) target = $region86
        $region85: #{ngram.1} parent=81 // pred_region
          %s233 = sand.u32 %s62, 1
          %s234 = sand.u32 %s62, 1
          %s235 = smul.addr %s234, 32
          %s236 = scalar_lea.vmem [#allocation4], %s235
        $region86: #{ngram.1} parent=81 // pred_fallthru
          _
      $region82: #{ngram.1} parent=5 // pred_fallthru
        _
    $region6: #{ngram.1} parent=1 // loop_footer
      %s12 = sadd.s32 1, %s8
    $region7: #{ngram.1} parent=1 // loop_footer_branch
      %7 = sbr.rel target = $region3
    $region8: #{ngram.1} parent=1 // loop_exit
      _
    %237 = vsyncpa [#allocation3], 1
    %s238 = scalar_lea.sflag [#allocation3], 1
    %239 = vsyncpa %s238, 1

</llo_original>
